<compile_context>
chip_gen: v6e
topology: v6e:2x2x1
jax: 0.10.0
libtpu: 0.0.40
codegen_flags: <defaults>
</compile_context>

<pallas_src>
import functools
import math

import numpy as np
import jax
import jax.numpy as jnp
from jax.experimental import pallas as pl
from jax.experimental.pallas import tpu as pltpu


def _round_up(a, b):
    return (a + b - 1) // b * b


def _cdiv(a, b):
    return (a + b - 1) // b


# ---------------------------------------------------------------------------
# Hardware-aware budgets: v7x has 64 MiB VMEM per TensorCore, v5e/v6e 128 MiB.
# target_tile_bytes is the f32 working-slab size (TR x LO x 4) per grid step.
# ---------------------------------------------------------------------------
def _hw_budgets():
    vmem_cap = None
    try:
        info = pltpu.get_tpu_info()
        vmem_cap = getattr(info, "vmem_capacity_bytes", None)
    except Exception:  # defensive: fall back to the large-VMEM defaults
        vmem_cap = None
    if not vmem_cap:
        vmem_cap = 128 * 1024 * 1024
    if vmem_cap <= 64 * 1024 * 1024:          # v7x-class TensorCore
        return 6 * 1024 * 1024, 40 * 1024 * 1024
    return 8 * 1024 * 1024, 64 * 1024 * 1024  # v5e / v6e


# ---------------------------------------------------------------------------
# One-time probe of pltpu.roll's rotation convention (insurance: the scan needs
# lane c to receive lane c - shift; if the convention is reversed we rotate by
# LO - shift instead, which is identical for a circular rotate).
# ---------------------------------------------------------------------------
@functools.lru_cache(maxsize=None)
def _roll_matches_jnp_roll() -> bool:
    def probe(x_ref, o_ref):
        o_ref[...] = pltpu.roll(x_ref[...], shift=1, axis=1)

    with jax.ensure_compile_time_eval():
        x = jnp.arange(8 * 128, dtype=jnp.float32).reshape(8, 128)
        y = pl.pallas_call(
            probe, out_shape=jax.ShapeDtypeStruct((8, 128), jnp.float32))(x)
        return bool(np.asarray(y)[0, 1] == 0.0)


def _const_spec(shape):
    """BlockSpec for a grid-invariant operand; single-buffered when supported."""
    idx = lambda i: (0, 0)
    try:
        return pl.BlockSpec(shape, idx, pipeline_mode=pl.Buffered(1))
    except Exception:  # older BlockSpec without pipeline_mode
        return pl.BlockSpec(shape, idx)


def _unary_encoding_kernel(x_ref, edges_ref, sel_ref, mask_ref, out_ref, *, shifts):
    # x_ref:     (TR, GF)  f32   folded inputs (G batch rows per kernel row)
    # edges_ref: (1,  LO)  f32   folded flat bin edges
    # sel_ref:   (GF, LO)  f32   0/1 selector, exactly one 1 per output lane
    # mask_ref:  (NL, LO)  f32   scan masks: 1 where (lane % NB) >= 2**lvl
    # out_ref:   (TR, LO)        lane-dense flattened (..., F, NB) output tile
    x = x_ref[...]

    # Selection on the MXU.  HIGHEST precision keeps the one-hot contraction
    # bit-exact (x must not be truncated to bf16, or sign(x - edge) could flip).
    xs = jax.lax.dot_general(
        x, sel_ref[...],
        dimension_numbers=(((1,), (0,)), ((), ())),
        precision=jax.lax.Precision.HIGHEST,
        preferred_element_type=jnp.float32,
    )
    diff = xs - edges_ref[...]

    # sign(diff) in {-1, 0, +1} (f32), straight from compares (no extra cast pass).
    y = jnp.where(diff > 0.0, 1.0, jnp.where(diff < 0.0, -1.0, 0.0))

    # Segmented inclusive prefix sum over each feature's NB bins: masked
    # Hillis-Steele scan.  Rolls run on the XLU slot; the mask kills any
    # contribution that would cross a feature-block (or fold-row) boundary.
    for lvl, shift in enumerate(shifts):
        y = y + pltpu.roll(y, shift=shift, axis=1) * mask_ref[lvl:lvl + 1, :]

    out_ref[...] = jnp.clip(y, 0.0, 1.0).astype(out_ref.dtype)


_FOLD_SEL_BYTES_CAP = 4 * 1024 * 1024   # max folded-selector size before giving up on folding
_SEL_BYTES_LIMIT = 8 * 1024 * 1024      # max selector size for a single feature tile


def unary_encoding_impl(x, edges, *, target_tile_bytes=None,
                        vmem_limit_bytes=None, out_dtype=jnp.bfloat16):
    """Pallas forward of _UnaryEncodingImpl.

    x: (..., F), edges: (F, NB) per-feature bin left edges (+inf padded).
    Returns clamp(cumsum(sign(x[..., None] - edges), -1), 0, 1) of shape (..., F, NB).
    Output values are exactly {0, 1}, so the bfloat16 default is lossless.
    """
    x = jnp.asarray(x)
    if x.ndim < 2:
        raise ValueError("The input must have at least two dimensions")
    edges = jnp.asarray(edges, dtype=jnp.float32)
    *lead, F = x.shape
    if edges.shape[0] != F:
        raise ValueError("edges.shape[0] must match the number of features")
    NB = int(edges.shape[1])
    L = F * NB

    default_tile, default_vmem = _hw_budgets()
    if target_tile_bytes is None:
        target_tile_bytes = default_tile
    if vmem_limit_bytes is None:
        vmem_limit_bytes = default_vmem

    # ---- lane folding: make the stored last dim a multiple of 128 ------------
    G = 128 // math.gcd(L, 128)
    if G > 1 and ((G * F) * (G * L) * 4 > _FOLD_SEL_BYTES_CAP or G * L > 8192):
        G = 1  # folded selector would be too large; accept masked partial stores
    GF, LO = G * F, G * L
    if GF * LO * 4 > _SEL_BYTES_LIMIT:
        # TODO(synk): tile the feature axis (selector / masks are identical per
        # feature tile, only the edges slice changes) for very large F * NB.
        raise NotImplementedError("F * total_n_bins too large for a single feature tile")

    # ---- grid-invariant constants (hoisted out of the kernel loop) -----------
    sel_u = np.repeat(np.eye(F, dtype=np.float32), NB, axis=1)                # (F, L)
    sel = sel_u if G == 1 else np.kron(np.eye(G, dtype=np.float32), sel_u)    # (GF, LO)
    sel = jnp.asarray(sel)

    edges_flat = edges.reshape(1, L)
    edges_fold = edges_flat if G == 1 else jnp.tile(edges_flat, (1, G))       # (1, LO)

    num_levels = (NB - 1).bit_length() if NB > 1 else 0
    bin_idx = np.arange(LO) % NB
    masks = np.zeros((max(num_levels, 1), LO), dtype=np.float32)
    for lvl in range(num_levels):
        masks[lvl] = (bin_idx >= (1 << lvl)).astype(np.float32)
    masks = jnp.asarray(masks)

    shifts = tuple(1 << lvl for lvl in range(num_levels))
    if num_levels and not _roll_matches_jnp_roll():
        shifts = tuple(LO - s for s in shifts)  # reversed rotate convention

    # ---- batch tiling over folded rows, sized by the f32 working slab --------
    B = int(np.prod(lead))
    rows_needed = _cdiv(B, G)
    rows_min = _round_up(rows_needed, 8)
    slab_row_bytes = LO * 4
    tr = max(8, (target_tile_bytes // slab_row_bytes) // 8 * 8)
    tr = min(tr, rows_min)
    # Prefer >= 2 grid steps so the "parallel" axis can shard across TensorCores.
    if _cdiv(rows_needed, tr) < 2 and rows_min >= 16:
        tr = max(8, _round_up(_cdiv(rows_needed, 2), 8))
    rows_total = _round_up(rows_needed, tr)
    b_pad = rows_total * G

    x2 = x.reshape(B, F).astype(jnp.float32)
    if b_pad != B:
        x2 = jnp.pad(x2, ((0, b_pad - B), (0, 0)))
    x_fold = x2.reshape(rows_total, GF)       # row-major reinterpretation (free)

    kernel = functools.partial(_unary_encoding_kernel, shifts=shifts)
    out_fold = pl.pallas_call(
        kernel,
        out_shape=jax.ShapeDtypeStruct((rows_total, LO), out_dtype),
        grid=(rows_total // tr,),
        in_specs=[
            pl.BlockSpec((tr, GF), lambda i: (i, 0)),
            _const_spec((1, LO)),
            _const_spec((GF, LO)),
            _const_spec((masks.shape[0], LO)),
        ],
        out_specs=pl.BlockSpec((tr, LO), lambda i: (i, 0)),
        compiler_params=pltpu.CompilerParams(
            dimension_semantics=("parallel",),
            vmem_limit_bytes=vmem_limit_bytes,
        ),
    )(x_fold, edges_fold, sel, masks)

    out = out_fold.reshape(b_pad, L)[:B]      # row-major reinterpretation + slice
    return out.reshape(tuple(lead) + (F, NB))


def build_unary_encoding_params(bins):
    """Mirrors UnaryEncoding.__init__ (edges buffer, real-bin indices, same-count flag)."""
    if not bins:
        raise ValueError("The list of bins must not be empty")
    max_n_edges = max(len(b) for b in bins)
    F = len(bins)
    NB = max_n_edges - 1
    edges = np.full((F, max_n_edges), np.inf, dtype=np.float32)
    mask = np.zeros((F, NB), dtype=bool)
    for f, b in enumerate(bins):
        b = np.asarray(b, dtype=np.float32)
        edges[f, : len(b)] = b
        mask[f, : len(b) - 1] = True
    bin_counts = tuple(len(b) - 1 for b in bins)
    return {
        "edges": jnp.asarray(edges[:, :-1]),                        # (F, NB)
        "keep_idx": jnp.asarray(np.flatnonzero(mask.reshape(-1))),  # real bins, row-major
        "same_bin_count": all(c == bin_counts[0] for c in bin_counts),
    }


def unary_encoding_forward(x, params, **kwargs):
    """Pallas-backed equivalent of UnaryEncoding.forward."""
    y = unary_encoding_impl(x, params["edges"], **kwargs)           # (..., F, NB)
    flat = y.reshape(y.shape[:-2] + (-1,))                          # (..., F*NB)
    if params["same_bin_count"]:
        return flat
    return flat[..., params["keep_idx"]]                            # keep real bins only


def unary_encoding_reference(x, params):
    # Pure-JAX reference mirroring the PyTorch forward.
    d = x[..., None] - params["edges"]
    y = jnp.clip(jnp.cumsum(jnp.sign(d), axis=-1), 0.0, 1.0)
    flat = y.reshape(y.shape[:-2] + (-1,))
    if params["same_bin_count"]:
        return flat
    return flat[..., params["keep_idx"]]


if __name__ == "__main__":
    key = jax.random.PRNGKey(0)
    k_bins, k_x, k_bins2, k_x2, k_x3 = jax.random.split(key, 5)

    def check(out, ref):
        np.testing.assert_allclose(np.asarray(out).astype(np.float32),
                                   np.asarray(ref).astype(np.float32),
                                   atol=1e-6, rtol=0)

    # Case 1: variable bin counts per feature (masked-output branch); L = 20 is
    # small, so the lane-folding path (32 rows folded into 640 lanes) is used.
    n_edges_per_feature = [5, 4, 6, 3]
    bkeys = jax.random.split(k_bins, len(n_edges_per_feature))
    bins = [np.sort(np.asarray(jax.random.uniform(bk, (n,), minval=-1.0, maxval=1.0),
                               dtype=np.float32))
            for bk, n in zip(bkeys, n_edges_per_feature)]
    params = build_unary_encoding_params(bins)

    B, F = 41, len(bins)          # odd batch exercises the padding path
    x = jax.random.normal(k_x, (B, F), dtype=jnp.float32)

    out = jax.block_until_ready(unary_encoding_forward(x, params))
    ref = unary_encoding_reference(x, params)
    check(out, ref)

    # Same inputs with an f32 output override (default is lossless bf16).
    out_f32 = jax.block_until_ready(
        unary_encoding_forward(x, params, out_dtype=jnp.float32))
    check(out_f32, ref)

    # Case 2: equal bin counts, >2-D leading batch (flatten branch); L = 9 -> G = 128 fold.
    n_edges2 = [4, 4, 4]
    bkeys2 = jax.random.split(k_bins2, len(n_edges2))
    bins2 = [np.sort(np.asarray(jax.random.uniform(bk, (n,), minval=-2.0, maxval=2.0),
                                dtype=np.float32))
             for bk, n in zip(bkeys2, n_edges2)]
    params2 = build_unary_encoding_params(bins2)
    x2 = jax.random.normal(k_x2, (2, 7, len(bins2)), dtype=jnp.float32)

    out2 = jax.block_until_ready(unary_encoding_forward(x2, params2))
    check(out2, unary_encoding_reference(x2, params2))

    # Case 3: F=32, NB=4 -> L=128 (already lane-aligned, no fold), larger batch;
    # exercises the multi-step grid and the >=2-step (megacore) split.
    F3, NE3 = 32, 5
    bins3 = [np.sort(np.asarray(jax.random.uniform(k, (NE3,), minval=-3.0, maxval=3.0),
                                dtype=np.float32))
             for k in jax.random.split(jax.random.PRNGKey(3), F3)]
    params3 = build_unary_encoding_params(bins3)
    x3 = jax.random.normal(k_x3, (530, F3), dtype=jnp.float32)
    ref3 = unary_encoding_reference(x3, params3)

    out3 = jax.block_until_ready(unary_encoding_forward(x3, params3))
    check(out3, ref3)

    # Tiny tile budget forces a multi-step grid through the same code path.
    out3s = jax.block_until_ready(
        unary_encoding_forward(x3, params3, target_tile_bytes=64 * 1024))
    check(out3s, ref3)

    print("KERNEL_OK")
</pallas_src>

<mosaic_0001>
module attributes {stable_mosaic.version = 11 : i64} {
  func.func @probe(%arg0: memref<8x128xf32, #tpu.memory_space<vmem>>, %arg1: memref<8x128xf32, #tpu.memory_space<vmem>>) attributes {dimension_semantics = [], scalar_prefetch = 0 : i64, scratch_operands = 0 : i64, tpu.core_type = #tpu.core_type<tc>} {
    %c0 = arith.constant 0 : index
    %c0_0 = arith.constant 0 : index
    %0 = vector.load %arg0[%c0, %c0_0] : memref<8x128xf32, #tpu.memory_space<vmem>>, vector<8x128xf32>
    %c1_i32 = arith.constant 1 : i32
    %1 = tpu.dynamic_rotate %0 by %c1_i32 dim 1 : vector<8x128xf32>, i32 -> vector<8x128xf32>
    %c0_1 = arith.constant 0 : index
    %c0_2 = arith.constant 0 : index
    %2 = vector.load %arg1[%c0_1, %c0_2] : memref<8x128xf32, #tpu.memory_space<vmem>>, vector<8x128xf32>
    tpu.vector_store %arg1[%c0_1, %c0_2], %1 {strides = array<i32>} : memref<8x128xf32, #tpu.memory_space<vmem>>, vector<8x128xf32>,
    return
  }
}

</mosaic_0001>

<llo_original>
// kernel: tpu_custom_call.1
$region0: #{tpu_custom_call.1}
  #allocation0 [shape = 'u32[]', space=smem, size = 0x4, offset = 0x4, fixed_abs, tag = 'smem constant byte address 0x4 - core index']
  #allocation1 [shape = 'u32[144,128]{1,0:T(1,128)}', space=vmem, size = 0x12000, scoped, tag = 'internal scratch']
  %s0 = inlined_call_operand.hbm [shape: f32[8,128], index: 0, kind: input, shape index: {}]
  %s1 = inlined_call_operand.hbm [shape: f32[8,128], index: 1, kind: output, shape index: {}]
  %s2 = sld [smem:[#allocation0]]
  $region18: #{tpu_custom_call.1} parent=0
    _
  %s4 = ssub.s32 1, %s2
  %s5 = scalar_select 0, %s4, %s2
  $region1: #{tpu_custom_call.1} parent=0
    #allocation2 [shape = 'u8[4096]{0}', space=vmem, size = 0x1000, scoped, tag = 'input window, operand 0, single buffered']
    #allocation3 [shape = 's32[1]{0}', space=sflag, size = 0x4, scoped, tag = 'scoped memory for tpu_custom_call.1']
    #allocation4 [shape = 's32[1]{0}', space=sflag, size = 0x4, scoped, tag = 'scoped memory for tpu_custom_call.1']
    #allocation5 [shape = 'u8[4096]{0}', space=vmem, size = 0x1000, scoped, tag = 'output window, operand 0, single buffered']
    %6 = vsyncpa [#allocation3], 0
    %7 = vsyncpa [#allocation4], 0
    // Predicated region
    $region2: #{tpu_custom_call.1} parent=1 // pred_check
      _
    $region3: #{tpu_custom_call.1} parent=1 // pred_check_branch
      %9 = sbr.rel (0) target = $region5
    $region4: #{tpu_custom_call.1} parent=1 // pred_region
      %s11 = ssub.s32 128, 128
      %12 = vsyncadd [#allocation3], %s11
      %s14 = sshll.u32 [#allocation2], 4
      %s15 = int_to_ptr.vmem [resolvable:$true] %s14
      %17 = dma.hbm_to_vmem [thread:$0]  %s0, 128, %s15, [#allocation3]
    $region5: #{tpu_custom_call.1} parent=1 // pred_fallthru
      _
    // Predicated region
    $region6: #{tpu_custom_call.1} parent=1 // pred_check
      _
    $region7: #{tpu_custom_call.1} parent=1 // pred_check_branch
      %19 = sbr.rel (0) target = $region9
    $region8: #{tpu_custom_call.1} parent=1 // pred_region
      %20 = dma.done [#allocation3], 128
    $region9: #{tpu_custom_call.1} parent=1 // pred_fallthru
      _
    %v21 = vld [vmem:[#allocation2] sm:$0xff]
    %22 = vrot.lane.b32.xlu0 %v21, 1
    %v23 = vpop.permute.xlu0 %22
    %24 = vst [vmem:[#allocation5] sm:$0xff] %v23
    // Predicated region
    $region10: #{tpu_custom_call.1} parent=1 // pred_check
      _
    $region11: #{tpu_custom_call.1} parent=1 // pred_check_branch
      %26 = sbr.rel (0) target = $region13
    $region12: #{tpu_custom_call.1} parent=1 // pred_region
      %s28 = ssub.s32 128, 128
      %29 = vsyncadd [#allocation4], %s28
      %s31 = sshll.u32 [#allocation5], 4
      %s32 = int_to_ptr.vmem [resolvable:$true] %s31
      %34 = dma.vmem_to_hbm [thread:$0]  %s32, 128, %s1, [#allocation4]
    $region13: #{tpu_custom_call.1} parent=1 // pred_fallthru
      _
    // Predicated region
    $region14: #{tpu_custom_call.1} parent=1 // pred_check
      _
    $region15: #{tpu_custom_call.1} parent=1 // pred_check_branch
      %36 = sbr.rel (0) target = $region17
    $region16: #{tpu_custom_call.1} parent=1 // pred_region
      %37 = dma.done [#allocation4], 128
    $region17: #{tpu_custom_call.1} parent=1 // pred_fallthru
      _
    %38 = vsyncpa [#allocation3], 1
    %39 = vsyncpa [#allocation4], 1

</llo_original>
